<compile_context>
chip_gen: v7x
topology: tpu7x:2x2x1
jax: 0.10.0
libtpu: 0.0.40
codegen_flags: <defaults>
</compile_context>

<pallas_src>
import functools
import math

import jax
import jax.numpy as jnp
from jax import lax
from jax.experimental import pallas as pl
from jax.experimental.pallas import tpu as pltpu


def _target_enhance_kernel(batch, two_e, tb,
                           gamma_ref, act_ref, wt_ref, out_ref, acc_ref):
    p = pl.program_id(0)   # phase: 0 = reduce batch-sum of Sim, 1 = apply
    j = pl.program_id(1)   # batch tile

    act = act_ref[...]                                  # [tb, 4E] input dtype (MXU operand)
    c_target = act[:, :two_e].astype(jnp.float32)       # f32 for the elementwise path
    c_last = act[:, two_e:].astype(jnp.float32)

    # --- cosine similarity along features (torch default dim=1, eps=1e-8) ---
    dot = jnp.sum(c_last * c_target, axis=-1, keepdims=True)            # [tb,1]
    sq_l = jnp.sum(c_last * c_last, axis=-1, keepdims=True)
    sq_t = jnp.sum(c_target * c_target, axis=-1, keepdims=True)
    eps2 = jnp.float32(1e-16)                                           # (1e-8)^2
    # 1/max(sqrt(s), eps) == rsqrt(max(s, eps^2)); rsqrt runs on the EUP.
    sim = dot * lax.rsqrt(jnp.maximum(sq_l, eps2)) \
              * lax.rsqrt(jnp.maximum(sq_t, eps2))                      # [tb,1]

    @pl.when(p == 0)
    def _reduce():                       # phase 0: accumulate sum(Sim) over the batch
        @pl.when(j == 0)
        def _init():
            acc_ref[...] = jnp.zeros_like(acc_ref)
        # Mask padded tail rows of the last batch tile out of the batch mean.
        row = j * tb + lax.broadcasted_iota(jnp.int32, (tb, 1), 0)
        sim_valid = jnp.where(row < batch, sim, 0.0)
        acc_ref[...] = acc_ref[...] + jnp.sum(sim_valid, keepdims=True)  # (1,1)

    @pl.when(p == 1)
    def _apply():                        # phase 1: threshold + fused matmul + select
        threshold = gamma_ref[0] * acc_ref[...] * jnp.float32(1.0 / batch)  # (1,1)
        condition = (sim - threshold) > 0                                   # [tb,1]
        # Single fused matmul [tb,4E] @ [4E,2E]; operands in input dtype,
        # f32 accumulation on the MXU.
        positive = jnp.dot(act, wt_ref[...], preferred_element_type=jnp.float32)
        out_ref[...] = jnp.where(condition, positive, c_target).astype(out_ref.dtype)


def target_enhance(c_last, c_target, w_t, gamma, *, block_rows=1024):
    """C_last, C_target: [B, 2E]; w_t: pre-transposed nn.Linear weight [4E, 2E].

    gamma may be a Python float or a traced scalar; it is fed to the kernel
    through SMEM, so changing it does NOT trigger a kernel recompile.
    block_rows: batch-tile size; the tile is only [tb, 4E] wide, so a large
    tile (default 1024 rows) amortizes the ~0.35 us per-grid-step overhead
    while staying tiny relative to VMEM.
    """
    B, D = c_target.shape
    four_e, two_e = w_t.shape
    assert D == two_e and four_e == 2 * two_e, "weight / activation shape mismatch"

    # Concat in the wrapper (XLA fuses it) -> one K=4E matmul in the kernel.
    act = jnp.concatenate([c_target, c_last], axis=-1)                  # [B, 4E]
    gamma_arr = jnp.asarray(gamma, dtype=jnp.float32).reshape((1,))

    # Batch tile: multiple of 8 (sublane) or the full batch.
    tb = B if B <= block_rows else block_rows
    n_tiles = pl.cdiv(B, tb)

    kernel = functools.partial(_target_enhance_kernel, B, two_e, tb)

    grid_spec = pltpu.PrefetchScalarGridSpec(
        num_scalar_prefetch=0,
        grid=(2, n_tiles),                                              # (phase, batch tile)
        in_specs=[
            pl.BlockSpec(memory_space=pltpu.MemorySpace.SMEM),          # gamma scalar
            pl.BlockSpec((tb, four_e), lambda p, j: (j, 0)),            # act
            pl.BlockSpec((four_e, two_e), lambda p, j: (0, 0)),         # W_t (resident)
        ],
        # Phase-gated output index: phase 0 parks on block 0 (never written),
        # phase 1 writes block j.  Each output block is written back exactly
        # once, with its final contents.
        out_specs=pl.BlockSpec((tb, two_e), lambda p, j: (j * p, 0)),
        scratch_shapes=[pltpu.VMEM((1, 1), jnp.float32)],               # sum(Sim) accumulator
    )

    return pl.pallas_call(
        kernel,
        out_shape=jax.ShapeDtypeStruct((B, two_e), c_target.dtype),
        grid_spec=grid_spec,
        compiler_params=pltpu.CompilerParams(
            dimension_semantics=("arbitrary", "arbitrary")),
    )(gamma_arr, act, w_t)


def _reference(c_last, c_target, w, gamma):
    """Plain-JAX replica of the PyTorch forward, for a sanity check."""
    eps = 1e-8
    dot = jnp.sum(c_last * c_target, axis=-1)
    n1 = jnp.maximum(jnp.linalg.norm(c_last, axis=-1), eps)
    n2 = jnp.maximum(jnp.linalg.norm(c_target, axis=-1), eps)
    sim = dot / (n1 * n2)
    threshold = gamma * jnp.mean(sim, axis=0)
    cond = (sim - threshold) > 0
    positive = jnp.concatenate([c_target, c_last], axis=-1) @ w.T
    return jnp.where(cond[:, None], positive, c_target)


if __name__ == "__main__":
    emb_size = 16          # C_* feature dim = 2E = 32, linear input = 4E = 64
    gamma = 0.5
    B = 16                 # with block_rows=8 -> grid (2 phases, 2 batch tiles)

    key = jax.random.PRNGKey(0)
    k1, k2, k3 = jax.random.split(key, 3)
    c_last = jax.random.normal(k1, (B, 2 * emb_size), dtype=jnp.float32)
    c_target = jax.random.normal(k2, (B, 2 * emb_size), dtype=jnp.float32)
    # nn.Linear(4E, 2E, bias=False) weight: [out=2E, in=4E]
    bound = 1.0 / math.sqrt(4.0 * emb_size)
    w = jax.random.uniform(k3, (2 * emb_size, 4 * emb_size),
                           minval=-bound, maxval=bound, dtype=jnp.float32)
    w_t = jnp.transpose(w)   # cache the transposed weight once, outside the kernel

    # Small block_rows to exercise the multi-tile (two-phase reduce) path.
    out = target_enhance(c_last, c_target, w_t, gamma, block_rows=8)
    out = jax.block_until_ready(out)

    ref = _reference(c_last, c_target, w, gamma)
    assert out.shape == (B, 2 * emb_size)
    assert jnp.allclose(out, ref, atol=1e-5, rtol=1e-5), "mismatch vs reference"

    print("KERNEL_OK")
</pallas_src>

<mosaic_0001>
module attributes {stable_mosaic.version = 11 : i64} {
  func.func @_target_enhance_kernel(%arg0: i32, %arg1: i32, %arg2: memref<1xf32, #tpu.memory_space<smem>>, %arg3: memref<8x64xf32, #tpu.memory_space<vmem>>, %arg4: memref<64x32xf32, #tpu.memory_space<vmem>>, %arg5: memref<8x32xf32, #tpu.memory_space<vmem>>, %arg6: memref<1x1xf32, #tpu.memory_space<vmem>>) attributes {dimension_semantics = [#tpu.dimension_semantics<arbitrary>, #tpu.dimension_semantics<arbitrary>], iteration_bounds = array<i64: 2, 2>, scalar_prefetch = 0 : i64, scratch_operands = 1 : i64, tpu.core_type = #tpu.core_type<tc>, window_params = [{transform_indices = @transform_0, window_bounds = array<i64: 1>}, {transform_indices = @transform_1, window_bounds = array<i64: 8, 64>}, {pipeline_mode = #tpu.pipeline_mode<synchronous>, transform_indices = @transform_2, window_bounds = array<i64: 64, 32>}, {transform_indices = @transform_3, window_bounds = array<i64: 8, 32>}]} {
    %c0 = arith.constant 0 : index
    %c0_0 = arith.constant 0 : index
    %0 = vector.load %arg3[%c0, %c0_0] : memref<8x64xf32, #tpu.memory_space<vmem>>, vector<8x64xf32>
    %1 = vector.extract_strided_slice %0 {offsets = [0, 0], sizes = [8, 32], strides = [1, 1]} : vector<8x64xf32> to vector<8x32xf32>
    %2 = vector.extract_strided_slice %0 {offsets = [0, 32], sizes = [8, 32], strides = [1, 1]} : vector<8x64xf32> to vector<8x32xf32>
    %3 = arith.mulf %2, %1 : vector<8x32xf32>
    %cst = arith.constant dense<0.000000e+00> : vector<8xf32>
    %4 = vector.multi_reduction <add>, %3, %cst [1] : vector<8x32xf32> to vector<8xf32>
    %5 = vector.shape_cast %4 : vector<8xf32> to vector<8x1xf32>
    %6 = arith.mulf %2, %2 : vector<8x32xf32>
    %cst_1 = arith.constant dense<0.000000e+00> : vector<8xf32>
    %7 = vector.multi_reduction <add>, %6, %cst_1 [1] : vector<8x32xf32> to vector<8xf32>
    %8 = vector.shape_cast %7 : vector<8xf32> to vector<8x1xf32>
    %9 = arith.mulf %1, %1 : vector<8x32xf32>
    %cst_2 = arith.constant dense<0.000000e+00> : vector<8xf32>
    %10 = vector.multi_reduction <add>, %9, %cst_2 [1] : vector<8x32xf32> to vector<8xf32>
    %11 = vector.shape_cast %10 : vector<8xf32> to vector<8x1xf32>
    %cst_3 = arith.constant 1.000000e-16 : f32
    %12 = vector.broadcast %cst_3 : f32 to vector<8x1xf32>
    %13 = arith.maximumf %8, %12 : vector<8x1xf32>
    %14 = math.rsqrt %13 : vector<8x1xf32>
    %15 = arith.mulf %5, %14 : vector<8x1xf32>
    %cst_4 = arith.constant 1.000000e-16 : f32
    %16 = vector.broadcast %cst_4 : f32 to vector<8x1xf32>
    %17 = arith.maximumf %11, %16 : vector<8x1xf32>
    %18 = math.rsqrt %17 : vector<8x1xf32>
    %19 = arith.mulf %15, %18 : vector<8x1xf32>
    %c0_i32 = arith.constant 0 : i32
    %20 = arith.cmpi eq, %arg0, %c0_i32 : i32
    %21 = arith.extui %20 : i1 to i32
    %c0_i32_5 = arith.constant 0 : i32
    %22 = arith.cmpi ne, %21, %c0_i32_5 : i32
    scf.if %22 {
      %c0_i32_7 = arith.constant 0 : i32
      %26 = arith.cmpi eq, %arg1, %c0_i32_7 : i32
      %27 = arith.extui %26 : i1 to i32
      %c0_i32_8 = arith.constant 0 : i32
      %28 = arith.cmpi ne, %27, %c0_i32_8 : i32
      scf.if %28 {
        %cst_15 = arith.constant 0.000000e+00 : f32
        %45 = vector.broadcast %cst_15 : f32 to vector<1x1xf32>
        %c0_16 = arith.constant 0 : index
        %c0_17 = arith.constant 0 : index
        %46 = vector.load %arg6[%c0_16, %c0_17] : memref<1x1xf32, #tpu.memory_space<vmem>>, vector<1x1xf32>
        tpu.vector_store %arg6[%c0_16, %c0_17], %45 {strides = array<i32>} : memref<1x1xf32, #tpu.memory_space<vmem>>, vector<1x1xf32>,
      } else {
      }
      %c8_i32 = arith.constant 8 : i32
      %29 = arith.muli %arg1, %c8_i32 : i32
      %30 = tpu.iota {dimensions = array<i32: 0>} : vector<8x1xi32>
      %31 = vector.broadcast %29 : i32 to vector<8x1xi32>
      %32 = arith.addi %31, %30 : vector<8x1xi32>
      %c16_i32 = arith.constant 16 : i32
      %33 = vector.broadcast %c16_i32 : i32 to vector<8x1xi32>
      %34 = arith.cmpi slt, %32, %33 : vector<8x1xi32>
      %cst_9 = arith.constant 0.000000e+00 : f32
      %35 = vector.broadcast %cst_9 : f32 to vector<8x1xf32>
      %36 = arith.select %34, %19, %35 : vector<8x1xi1>, vector<8x1xf32>
      %c0_10 = arith.constant 0 : index
      %c0_11 = arith.constant 0 : index
      %37 = vector.load %arg6[%c0_10, %c0_11] : memref<1x1xf32, #tpu.memory_space<vmem>>, vector<1x1xf32>
      %38 = vector.shape_cast %36 : vector<8x1xf32> to vector<1x8x1xf32>
      %cst_12 = arith.constant dense<0.000000e+00> : vector<1xf32>
      %39 = vector.multi_reduction <add>, %38, %cst_12 [1, 2] : vector<1x8x1xf32> to vector<1xf32>
      %40 = vector.shape_cast %39 : vector<1xf32> to vector<1x1x1xf32>
      %41 = vector.extract %40[0, 0, 0] : f32 from vector<1x1x1xf32>
      %42 = vector.broadcast %41 : f32 to vector<1x1xf32>
      %43 = arith.addf %37, %42 : vector<1x1xf32>
      %c0_13 = arith.constant 0 : index
      %c0_14 = arith.constant 0 : index
      %44 = vector.load %arg6[%c0_13, %c0_14] : memref<1x1xf32, #tpu.memory_space<vmem>>, vector<1x1xf32>
      tpu.vector_store %arg6[%c0_13, %c0_14], %43 {strides = array<i32>} : memref<1x1xf32, #tpu.memory_space<vmem>>, vector<1x1xf32>,
    } else {
    }
    %c1_i32 = arith.constant 1 : i32
    %23 = arith.cmpi eq, %arg0, %c1_i32 : i32
    %24 = arith.extui %23 : i1 to i32
    %c0_i32_6 = arith.constant 0 : i32
    %25 = arith.cmpi ne, %24, %c0_i32_6 : i32
    scf.if %25 {
      %c0_7 = arith.constant 0 : index
      %26 = memref.load %arg2[%c0_7] : memref<1xf32, #tpu.memory_space<smem>>
      %c0_8 = arith.constant 0 : index
      %c0_9 = arith.constant 0 : index
      %27 = vector.load %arg6[%c0_8, %c0_9] : memref<1x1xf32, #tpu.memory_space<vmem>>, vector<1x1xf32>
      %28 = vector.broadcast %26 : f32 to vector<1x1xf32>
      %29 = arith.mulf %28, %27 : vector<1x1xf32>
      %cst_10 = arith.constant 6.250000e-02 : f32
      %30 = vector.broadcast %cst_10 : f32 to vector<1x1xf32>
      %31 = arith.mulf %29, %30 : vector<1x1xf32>
      %32 = vector.broadcast %31 : vector<1x1xf32> to vector<8x1xf32>
      %33 = arith.subf %19, %32 : vector<8x1xf32>
      %cst_11 = arith.constant 0.000000e+00 : f32
      %34 = vector.broadcast %cst_11 : f32 to vector<8x1xf32>
      %35 = arith.cmpf ogt, %33, %34 : vector<8x1xf32>
      %c0_12 = arith.constant 0 : index
      %c0_13 = arith.constant 0 : index
      %36 = vector.load %arg4[%c0_12, %c0_13] : memref<64x32xf32, #tpu.memory_space<vmem>>, vector<64x32xf32>
      %cst_14 = arith.constant dense<0.000000e+00> : vector<8x32xf32>
      %37 = tpu.matmul %0, %36, %cst_14 {dimension_numbers = #tpu.dot_dimension_numbers<[1], [0], [0], [1], [0, 0, 1, 1], [], []>} : vector<8x64xf32>, vector<64x32xf32>, vector<8x32xf32> -> vector<8x32xf32>
      %38 = vector.shape_cast %35 : vector<8x1xi1> to vector<8x1xi1>
      %39 = vector.broadcast %38 : vector<8x1xi1> to vector<8x32xi1>
      %40 = arith.select %39, %37, %1 : vector<8x32xi1>, vector<8x32xf32>
      %c0_15 = arith.constant 0 : index
      %c0_16 = arith.constant 0 : index
      %41 = vector.load %arg5[%c0_15, %c0_16] : memref<8x32xf32, #tpu.memory_space<vmem>>, vector<8x32xf32>
      tpu.vector_store %arg5[%c0_15, %c0_16], %40 {strides = array<i32>} : memref<8x32xf32, #tpu.memory_space<vmem>>, vector<8x32xf32>,
    } else {
    }
    return
  }
  func.func @transform_0(%arg0: i32, %arg1: i32) -> i32 {
    %c0_i32 = arith.constant 0 : i32
    %c0_i32_0 = arith.constant 0 : i32
    return %c0_i32 : i32
  }
  func.func @transform_1(%arg0: i32, %arg1: i32) -> (i32, i32) {
    %c0_i32 = arith.constant 0 : i32
    %c0_i32_0 = arith.constant 0 : i32
    return %arg1, %c0_i32 : i32, i32
  }
  func.func @transform_2(%arg0: i32, %arg1: i32) -> (i32, i32) {
    %c0_i32 = arith.constant 0 : i32
    %c0_i32_0 = arith.constant 0 : i32
    %c0_i32_1 = arith.constant 0 : i32
    return %c0_i32, %c0_i32_0 : i32, i32
  }
  func.func @transform_3(%arg0: i32, %arg1: i32) -> (i32, i32) {
    %0 = arith.muli %arg1, %arg0 : i32
    %c0_i32 = arith.constant 0 : i32
    %c0_i32_0 = arith.constant 0 : i32
    return %0, %c0_i32 : i32, i32
  }
}

</mosaic_0001>

<llo_original>
// kernel: tpu_custom_call.1
$region0: #{tpu_custom_call.1}
  #allocation0 [shape = 'u32[]', space=smem, size = 0x4, offset = 0x4, fixed_abs, tag = 'smem constant byte address 0x4 - core index']
  #allocation1 [shape = 'u32[144,128]{1,0:T(1,128)}', space=vmem, size = 0x12000, scoped, tag = 'internal scratch']
  #allocation2 [shape = 'f32[1,1]{1,0:T(1,128)}', space=vmem, size = 0x200, scoped, tag = 'scratch operand']
  #allocation3 [shape = 'f32[1]{0:T(128)S(6)}', space=smem, size = 0x200, scoped, tag = 'scoped memory for tpu_custom_call.1']
  %s0 = inlined_call_operand.<no memory space> [shape: f32[1], index: 0, kind: input, shape index: {}]
  %s1 = inlined_call_operand.vmem [shape: f32[16,64], index: 1, kind: input, shape index: {}]
  %s2 = inlined_call_operand.vmem [shape: f32[64,32], index: 2, kind: input, shape index: {}]
  %s3 = inlined_call_operand.hbm [shape: f32[16,32], index: 3, kind: output, shape index: {}]
  %s4 = sld [smem:[#allocation0]]
  $region57: #{tpu_custom_call.1} parent=0
    _
  %s6 = ssub.s32 1, %s4
  %s7 = scalar_select 0, %s6, %s4
  %8 = sst [smem:[#allocation3]] %s0
  $region1: #{tpu_custom_call.1} parent=0
    #allocation4 [shape = 'u8[8192]{0}', space=vmem, size = 0x2000, scoped, tag = 'output window, operand 0']
    #allocation5 [shape = 's32[2]{0}', space=sflag, size = 0x8, scoped, tag = 'scoped memory for tpu_custom_call.1']
    %9 = vsyncpa [#allocation5], 0
    %s10 = scalar_lea.sflag [#allocation5], 1
    %11 = vsyncpa %s10, 0
    loop: start=0, step=1, limit=6
    $region2: #{tpu_custom_call.1} parent=1 // loop_pre_header
      _
    $region3: #{tpu_custom_call.1} parent=1 // loop_header
      %s13 = sphi 0, %s17
      %p14 = scmp.ge.s32.totalorder %s13, 6
      %s20 = sphi 0, %s32
      %s21 = sphi 0, %s28
      %s22 = sphi 0, %s20
      %s23 = sphi 0, %s21
      %s24 = sphi 0, %s22
      %s25 = sphi 0, %s23
      %s33 = sphi 0, %s33
      %s35 = sphi 0, %s33
      %s36 = sphi 0, %s35
      %s50 = sphi 0, %s36
      %s56 = sphi 0, %s58
      %s59 = sphi 0, %s56
      %s60 = sphi 0, %s59
      %s76 = sphi 0, %s60
      %s80 = sphi 0, %s80
      %s82 = sphi 0, %s80
      %s83 = sphi 0, %s82
      %s97 = sphi 0, %s83
      %s105 = sphi 0, %s107
      %s108 = sphi 0, %s105
      %s109 = sphi 0, %s108
      %s125 = sphi 0, %s109
    $region4: #{tpu_custom_call.1} parent=1 // loop_header_branch
      %16 = sbr.rel (%p14) target = $region8
    $region5: #{tpu_custom_call.1} parent=1 // loop_body
      %s18 = ssub.s32 %s13, 1
      %s19 = ssub.s32 %s13, 2
      %s26 = sadd.s32 1, %s21
      %p27 = scmp.ge.s32.totalorder %s26, 2
      %s28 = scalar_select %p27, 0, %s26
      %s29 = sadd.s32 1, %s20
      %s30 = scalar_select %p27, %s29, %s20
      %p31 = scmp.ge.s32.totalorder %s30, 2
      %s32 = scalar_select %p31, 0, %s30
      %s34 = sadd.s32 %s33, 1
      %p37 = scmp.eq.s32.totalorder %s13, 3
      %p38 = scmp.ne.s32.totalorder %s33, %s35
      %p39 = scmp.eq.s32.totalorder %s13, 0
      %p40 = por %p38, %p39
      %p41 = scmp.ne.s32.totalorder %s33, %s35
      %p42 = scmp.eq.s32.totalorder %s18, 3
      %p43 = por %p41, %p42
      %p44 = scmp.ne.s32.totalorder %s35, %s36
      %p45 = scmp.eq.s32.totalorder %s18, 0
      %p46 = por %p44, %p45
      %p47 = scmp.ne.s32.totalorder %s35, %s36
      %p48 = scmp.eq.s32.totalorder %s19, 3
      %p49 = por %p47, %p48
      %p51 = scmp.ne.s32.totalorder %s36, %s50
      %p52 = scmp.eq.s32.totalorder %s19, 0
      %p53 = por %p51, %p52
      %s54 = ssub.s32 %s21, %s28
      %p55 = scmp.eq.s32.totalorder %s54, 0
      %s57 = sadd.s32 %s56, 1
      %s58 = scalar_select %p55, %s56, %s57
      %p61 = pneg %p55
      %p62 = scmp.eq.s32.totalorder %s13, 3
      %p63 = por %p61, %p62
      %p64 = scmp.ne.s32.totalorder %s56, %s59
      %p65 = scmp.eq.s32.totalorder %s13, 0
      %p66 = por %p64, %p65
      %p67 = scmp.ne.s32.totalorder %s56, %s59
      %p68 = scmp.eq.s32.totalorder %s18, 3
      %p69 = por %p67, %p68
      %p70 = scmp.ne.s32.totalorder %s59, %s60
      %p71 = scmp.eq.s32.totalorder %s18, 0
      %p72 = por %p70, %p71
      %p73 = scmp.ne.s32.totalorder %s59, %s60
      %p74 = scmp.eq.s32.totalorder %s19, 3
      %p75 = por %p73, %p74
      %p77 = scmp.ne.s32.totalorder %s60, %s76
      %p78 = scmp.eq.s32.totalorder %s19, 0
      %p79 = por %p77, %p78
      %s81 = sadd.s32 %s80, 1
      %p84 = scmp.eq.s32.totalorder %s13, 3
      %p85 = scmp.ne.s32.totalorder %s80, %s82
      %p86 = scmp.eq.s32.totalorder %s13, 0
      %p87 = por %p85, %p86
      %p88 = scmp.ne.s32.totalorder %s80, %s82
      %p89 = scmp.eq.s32.totalorder %s18, 3
      %p90 = por %p88, %p89
      %p91 = scmp.ne.s32.totalorder %s82, %s83
      %p92 = scmp.eq.s32.totalorder %s18, 0
      %p93 = por %p91, %p92
      %p94 = scmp.ne.s32.totalorder %s82, %s83
      %p95 = scmp.eq.s32.totalorder %s19, 3
      %p96 = por %p94, %p95
      %p98 = scmp.ne.s32.totalorder %s83, %s97
      %p99 = scmp.eq.s32.totalorder %s19, 0
      %p100 = por %p98, %p99
      %s101 = smul.u32 %s21, %s20
      %s102 = smul.u32 %s28, %s32
      %s103 = ssub.s32 %s101, %s102
      %p104 = scmp.eq.s32.totalorder %s103, 0
      %s106 = sadd.s32 %s105, 1
      %s107 = scalar_select %p104, %s105, %s106
      %p110 = pneg %p104
      %p111 = scmp.eq.s32.totalorder %s13, 3
      %p112 = por %p110, %p111
      %p113 = scmp.ne.s32.totalorder %s105, %s108
      %p114 = scmp.eq.s32.totalorder %s13, 0
      %p115 = por %p113, %p114
      %p116 = scmp.ne.s32.totalorder %s105, %s108
      %p117 = scmp.eq.s32.totalorder %s18, 3
      %p118 = por %p116, %p117
      %p119 = scmp.ne.s32.totalorder %s108, %s109
      %p120 = scmp.eq.s32.totalorder %s18, 0
      %p121 = por %p119, %p120
      %p122 = scmp.ne.s32.totalorder %s108, %s109
      %p123 = scmp.eq.s32.totalorder %s19, 3
      %p124 = por %p122, %p123
      %p126 = scmp.ne.s32.totalorder %s109, %s125
      %p127 = scmp.eq.s32.totalorder %s19, 0
      %p128 = por %p126, %p127
      %p129 = scmp.le.s32.totalorder 1, %s13
      %p130 = scmp.lt.s32.totalorder %s13, 5
      %p131 = pnand %p129, %p130
      %p132 = pneg %p131
      // Predicated region
      $region9: #{tpu_custom_call.1} parent=5 // pred_check
        _
      $region10: #{tpu_custom_call.1} parent=5 // pred_check_branch
        %134 = sbr.rel (%p131) target = $region12
      $region11: #{tpu_custom_call.1} parent=5 // pred_region
        %s135 = ssub.s32 %s13, 1
        // Predicated region
        $region13: #{tpu_custom_call.1} parent=11 // pred_check
          %p136 = pneg %p46
        $region14: #{tpu_custom_call.1} parent=11 // pred_check_branch
          %138 = sbr.rel (%p136) target = $region16
        $region15: #{tpu_custom_call.1} parent=11 // pred_region
          _
        $region16: #{tpu_custom_call.1} parent=11 // pred_fallthru
          _
        // Predicated region
        $region17: #{tpu_custom_call.1} parent=11 // pred_check
          %p139 = pneg %p93
        $region18: #{tpu_custom_call.1} parent=11 // pred_check_branch
          %141 = sbr.rel (%p139) target = $region20
        $region19: #{tpu_custom_call.1} parent=11 // pred_region
          _
        $region20: #{tpu_custom_call.1} parent=11 // pred_fallthru
          _
      $region12: #{tpu_custom_call.1} parent=5 // pred_fallthru
        _
      %p142 = scmp.lt.s32.totalorder %s13, 4
      // Predicated region
      $region21: #{tpu_custom_call.1} parent=5 // pred_check
        %p143 = pneg %p142
      $region22: #{tpu_custom_call.1} parent=5 // pred_check_branch
        %145 = sbr.rel (%p143) target = $region24
      $region23: #{tpu_custom_call.1} parent=5 // pred_region
        // Predicated region
        $region25: #{tpu_custom_call.1} parent=23 // pred_check
          %p146 = pneg %p66
        $region26: #{tpu_custom_call.1} parent=23 // pred_check_branch
          %148 = sbr.rel (%p146) target = $region28
        $region27: #{tpu_custom_call.1} parent=23 // pred_region
          %p149 = scmp.lt.s32.totalorder %s21, 1
          %s150 = scalar_select %p149, %s21, 1
          %s151 = smul.addr %s150, 8
          %s152 = scalar_lea.vmem %s1, %s151
        $region28: #{tpu_custom_call.1} parent=23 // pred_fallthru
          _
      $region24: #{tpu_custom_call.1} parent=5 // pred_fallthru
        _
      %p153 = scmp.le.s32.totalorder 1, %s13
      %p154 = scmp.lt.s32.totalorder %s13, 5
      %p155 = pnand %p153, %p154
      %p156 = pneg %p155
      // Predicated region
      $region29: #{tpu_custom_call.1} parent=5 // pred_check
        _
      $region30: #{tpu_custom_call.1} parent=5 // pred_check_branch
        %158 = sbr.rel (%p155) target = $region32
      $region31: #{tpu_custom_call.1} parent=5 // pred_region
        %s159 = ssub.s32 %s13, 1
        %p160 = pneg %p46
        %p161 = pneg %p43
        %p162 = scmp.lt.s32.totalorder %s23, 1
        %s163 = scalar_select %p162, %s23, 1
        %s164 = smul.addr %s163, 8
        %s165 = scalar_lea.vmem %s1, %s164
        %p166 = pneg %p72
        %p167 = pneg %p69
        %p168 = pneg %p93
        %p169 = pneg %p90
        %p170 = pneg %p121
        %p171 = pneg %p118
        %s172 = sand.u32 %s108, 1
        %s173 = scalar_lea.sflag [#allocation5], %s172
        %s174 = sand.u32 %s108, 1
        %s175 = smul.addr %s174, 8
        %s176 = scalar_lea.vmem [#allocation4], %s175
        %p177 = scmp.lt.s32.totalorder %s23, 1
        %s178 = scalar_select %p177, %s23, 1
        %s179 = smul.addr %s178, 8
        %s180 = scalar_lea.vmem %s1, %s179
        %s181 = smul.u32 %s23, %s22
        %v182 = vld [vmem:[%s180] sm:$0xff]
        %184 = vrot.lane.b32.xlu0 %v182, 32
        %v185 = vpop.permute.xlu0 %184
        %v187 = vmul.f32 %v182, %v185
        %189 = vrot.lane.b32.xlu0 %v187, 96
        %v190 = vpop.permute.xlu0 %189
        %vm192 = vcmask 261120
        %v193 = vsel %vm192, %v190, 0.0
        %194 = vadd.xlane.f32.xlu0 %v193
        %v195 = vpop.xlane.xlu0 %194
        %v196 = vmul.f32 %v182, %v182
        %198 = vrot.lane.b32.xlu0 %v196, 96
        %v199 = vpop.permute.xlu0 %198
        %v201 = vsel %vm192, %v199, 0.0
        %202 = vadd.xlane.f32.xlu0 %v201
        %v203 = vpop.xlane.xlu0 %202
        %v204 = vsel %vm192, %v196, 0.0
        %205 = vadd.xlane.f32.xlu0 %v204
        %v206 = vpop.xlane.xlu0 %205
        %v207 = vmax.f32 %v203, 1e-16
        %v208 = vrsqrt.pop %v207
        %v209 = vmul.f32 %v195, %v208
        %v210 = vmax.f32 %v206, 1e-16
        %v211 = vrsqrt.pop %v210
        %v212 = vmul.f32 %v209, %v211
        %p213 = scmp.eq.s32.totalorder %s22, 0
        // Predicated region
        $region33: #{tpu_custom_call.1} parent=31 // pred_check
          %p214 = pneg %p213
        $region34: #{tpu_custom_call.1} parent=31 // pred_check_branch
          %216 = sbr.rel (%p214) target = $region36
        $region35: #{tpu_custom_call.1} parent=31 // pred_region
          %p217 = scmp.eq.s32.totalorder %s23, 0
          // Predicated region
          $region37: #{tpu_custom_call.1} parent=35 // pred_check
            %p218 = pneg %p217
          $region38: #{tpu_custom_call.1} parent=35 // pred_check_branch
            %220 = sbr.rel (%p218) target = $region40
          $region39: #{tpu_custom_call.1} parent=35 // pred_region
            %vm221 = vcmask 0
            %222 = vst.msk [vmem:[#allocation2] sm:$0x1] %vm221, 0.0
          $region40: #{tpu_custom_call.1} parent=35 // pred_fallthru
            _
          %s223 = smul.u32 %s23, 8
          %v224 = vlaneseq
          %v225 = vshrl.u32 %v224, 7
          %v226 = vstv %s223
          %v227 = vadd.s32 %v226, %v225
          %vm228 = vcmp.lt.s32.totalorder %v227, 16
          %v229 = vsel %vm228, %v212, 0.0
          %v230 = vld [vmem:[#allocation2] sm:$0x1]
          %vm231 = vcmask 7168
          %v232 = vsel %vm231, %v229, 0.0
          %233 = vadd.xlane.f32.xlu0 %v232
          %v234 = vpop.xlane.xlu0 %233
          %v235 = vrot.slane %v234, 4
          %v236 = vadd.f32 %v234, %v235
          %v237 = vrot.slane %v236, 2
          %v238 = vadd.f32 %v236, %v237
          %v239 = vrot.slane %v238, 1
          %v240 = vadd.f32 %v238, %v239
          %s241 = vtos %v240
          %v242 = vstv %s241
          %v243 = vadd.f32 %v230, %v242
          %vm244 = vcmask 0
          %245 = vst.msk [vmem:[#allocation2] sm:$0x1] %vm244, %v243
        $region36: #{tpu_custom_call.1} parent=31 // pred_fallthru
          _
        %p246 = scmp.eq.s32.totalorder %s22, 1
        // Predicated region
        $region41: #{tpu_custom_call.1} parent=31 // pred_check
          %p247 = pneg %p246
        $region42: #{tpu_custom_call.1} parent=31 // pred_check_branch
          %249 = sbr.rel (%p247) target = $region44
        $region43: #{tpu_custom_call.1} parent=31 // pred_region
          %s250 = sld [smem:[#allocation3]]
          %v251 = vld [vmem:[#allocation2] sm:$0x1]
          %v252 = vstv %s250
          %v253 = vmul.f32 %v252, %v251
          %v254 = vmul.f32 %v253, 0.0625
          %v256 = vlaneseq
          %v257 = vshrl.u32 %v256, 7
          %v258 = vsub.s32 0, %v257
          %v259 = vrot.slane %v254, %v258
          %v261 = vsub.f32 %v212, %v259
          %vm262 = vcmp.gt.f32.partialorder %v261, 0.0
          %v263 = vld [vmem:[%s2] sm:$0xff]
          %v264 = vld [vmem:[%s2 + $0x8] sm:$0xff]
          %v265 = vld [vmem:[%s2 + $0x10] sm:$0xff]
          %v266 = vld [vmem:[%s2 + $0x18] sm:$0xff]
          %v267 = vld [vmem:[%s2 + $0x20] sm:$0xff]
          %v268 = vld [vmem:[%s2 + $0x28] sm:$0xff]
          %v269 = vld [vmem:[%s2 + $0x30] sm:$0xff]
          %v270 = vld [vmem:[%s2 + $0x38] sm:$0xff]
          %vm271 = vcmask 523264
          %v272 = vsel %vm271, %v182, 0
          %274 = vmatprep.subr.mxu0 0.0
          %275 = vmatpush1.msra.mxu0 %v263
          %276 = vmatprep.subr.mxu0 0.0
          %277 = vmatpush1.msra.mxu0 %v264
          %278 = vmatprep.subr.mxu0 0.0
          %279 = vmatpush1.msra.mxu0 %v265
          %280 = vmatprep.subr.mxu0 0.0
          %281 = vmatpush1.msra.mxu0 %v266
          %282 = vmatprep.subr.mxu0 0.0
          %283 = vmatpush1.msra.mxu0 %v267
          %284 = vmatprep.subr.mxu0 0.0
          %285 = vmatpush1.msra.mxu0 %v268
          %286 = vmatprep.subr.mxu0 0.0
          %287 = vmatpush1.msra.mxu0 %v269
          %288 = vmatprep.subr.mxu0 0.0
          %289 = vmatpush1.msra.mxu0 %v270
          %290 = vmatprep.subr.mxu0 0.0
          %291 = vmatpush1.msra.mxu0 0.0
          %292 = vmatprep.subr.mxu0 0.0
          %293 = vmatpush1.msra.mxu0 0.0
          %294 = vmatprep.subr.mxu0 0.0
          %295 = vmatpush1.msra.mxu0 0.0
          %296 = vmatprep.subr.mxu0 0.0
          %297 = vmatpush1.msra.mxu0 0.0
          %298 = vmatprep.subr.mxu0 0.0
          %299 = vmatpush1.msra.mxu0 0.0
          %300 = vmatprep.subr.mxu0 0.0
          %301 = vmatpush1.msra.mxu0 0.0
          %302 = vmatprep.subr.mxu0 0.0
          %303 = vmatpush1.msra.mxu0 0.0
          %304 = vmatprep.subr.mxu0 0.0
          %305 = vmatpush1.msra.mxu0 0.0
          %306 = vmatprep.subr.mxu0 0.0
          %307 = vmatpush1.msra.mxu0 0.0
          %308 = vmatprep.subr.mxu0 0.0
          %309 = vmatpush1.msra.mxu0 0.0
          %310 = vmatprep.subr.mxu0 0.0
          %311 = vmatpush1.msra.mxu0 0.0
          %312 = vmatprep.subr.mxu0 0.0
          %313 = vmatpush1.msra.mxu0 0.0
          %314 = vmatprep.subr.mxu0 0.0
          %315 = vmatpush1.msra.mxu0 0.0
          %316 = vmatprep.subr.mxu0 0.0
          %317 = vmatpush1.msra.mxu0 0.0
          %318 = vmatprep.subr.mxu0 0.0
          %319 = vmatpush1.msra.mxu0 0.0
          %320 = vmatprep.subr.mxu0 0.0
          %321 = vmatpush1.msra.mxu0 0.0
          %322 = vmatprep.subr.mxu0 0.0
          %323 = vmatpush1.msra.mxu0 0.0
          %324 = vmatprep.subr.mxu0 0.0
          %325 = vmatpush1.msra.mxu0 0.0
          %326 = vmatprep.subr.mxu0 0.0
          %327 = vmatpush1.msra.mxu0 0.0
          %328 = vmatprep.subr.mxu0 0.0
          %329 = vmatpush1.msra.mxu0 0.0
          %330 = vmatprep.subr.mxu0 0.0
          %331 = vmatpush1.msra.mxu0 0.0
          %332 = vmatprep.subr.mxu0 0.0
          %333 = vmatpush1.msra.mxu0 0.0
          %334 = vmatprep.subr.mxu0 0.0
          %335 = vmatpush1.msra.mxu0 0.0
          %336 = vmatprep.subr.mxu0 0.0
          %337 = vmatpush1.msra.mxu0 0.0
          %338 = vmatprep.mubr.f32.mxu0 0.0
          %339 = vmatmul.mubr.f32.gmra.mrb[0].mxu0 %v272
          %v340 = vpop.f32.mrb[0].mxu0
          %v341 = vadd.f32 0.0, %v340
          %v342 = vpop.f32.mrb[0].mxu0
          %343 = vdwg.mxu0
          %v344 = vsel %vm262, 1, 0
          %345 = vset.pattern.permute.xlu0 0
          %346 = vperm.xlu0 %345, %v344
          %v347 = vpop.permute.xlu0 %346
          %vm348 = vcmp.eq.s32.totalorder %v347, 1
          %v349 = vsel %vm348, %v341, %v182
          %350 = vst.msk [vmem:[%s176] sm:$0xff] %vm192, %v349
        $region44: #{tpu_custom_call.1} parent=31 // pred_fallthru
          _
        %s351 = sand.u32 %s108, 1
        %s352 = scalar_lea.sflag [#allocation5], %s351
        %s353 = sand.u32 %s108, 1
        %s354 = smul.addr %s353, 8
        %s355 = scalar_lea.vmem [#allocation4], %s354
        // Predicated region
        $region45: #{tpu_custom_call.1} parent=31 // pred_check
          %p356 = pneg %p118
        $region46: #{tpu_custom_call.1} parent=31 // pred_check_branch
          %358 = sbr.rel (%p356) target = $region48
        $region47: #{tpu_custom_call.1} parent=31 // pred_region
          %s359 = smul.u32 %s23, %s22
          %s361 = ssub.s32 128, 128
          %362 = vsyncadd %s352, %s361
          %s363 = smul.addr %s359, 128
          %s364 = scalar_lea.hbm %s3, %s363
          %s366 = sshll.u32 %s355, 4
          %s367 = int_to_ptr.vmem [resolvable:$true] %s366
          %369 = dma.vmem_to_hbm [thread:$0]  %s367, 128, %s364, %s352
        $region48: #{tpu_custom_call.1} parent=31 // pred_fallthru
          _
      $region32: #{tpu_custom_call.1} parent=5 // pred_fallthru
        _
      %p370 = scmp.le.s32.totalorder 2, %s13
      // Predicated region
      $region49: #{tpu_custom_call.1} parent=5 // pred_check
        %p371 = pneg %p370
      $region50: #{tpu_custom_call.1} parent=5 // pred_check_branch
        %373 = sbr.rel (%p371) target = $region52
      $region51: #{tpu_custom_call.1} parent=5 // pred_region
        %s374 = ssub.s32 %s13, 2
        // Predicated region
        $region53: #{tpu_custom_call.1} parent=51 // pred_check
          %p375 = pneg %p124
        $region54: #{tpu_custom_call.1} parent=51 // pred_check_branch
          %377 = sbr.rel (%p375) target = $region56
        $region55: #{tpu_custom_call.1} parent=51 // pred_region
          %s378 = sand.u32 %s109, 1
          %s379 = scalar_lea.sflag [#allocation5], %s378
          %s380 = sand.u32 %s109, 1
          %s381 = smul.addr %s380, 8
          %s382 = scalar_lea.vmem [#allocation4], %s381
          %383 = dma.done %s379, 128
        $region56: #{tpu_custom_call.1} parent=51 // pred_fallthru
          _
      $region52: #{tpu_custom_call.1} parent=5 // pred_fallthru
        _
    $region6: #{tpu_custom_call.1} parent=1 // loop_footer
      %s17 = sadd.s32 1, %s13
    $region7: #{tpu_custom_call.1} parent=1 // loop_footer_branch
      %12 = sbr.rel target = $region3
    $region8: #{tpu_custom_call.1} parent=1 // loop_exit
      _
    %384 = vsyncpa [#allocation5], 1
    %s385 = scalar_lea.sflag [#allocation5], 1
    %386 = vsyncpa %s385, 1

</llo_original>
